<compile_context>
chip_gen: v7x
topology: tpu7x:2x2x1
jax: 0.10.0
libtpu: 0.0.40
codegen_flags: <defaults>
</compile_context>

<pallas_src>
import numpy as np
import jax
import jax.numpy as jnp
from jax.experimental import pallas as pl
from jax.experimental.pallas import tpu as pltpu

# Max rows (of 128 lanes) per grid step.
# Per-step bytes = (3 in + 2 out) coord-planes * tile_r * 128 * 4 B = 5*tile_r*512 B.
# tile_r = 2048  ->  5 MiB/step, ~10 MiB double-buffered: fits v5e's 16 MiB
# scoped-VMEM default and leaves ample headroom on v6e/v7x.
_TILE_R_MAX = 2048


def _cdiv(a, b):
    return -(-a // b)


def _project_kernel(scal_ref, xyz_ref, uv_ref):
    # Last-source scalars, 1-D SMEM [16]:
    #   [src(3), det(3), u(3), v(3), w(3), w·(det-src)(1)]
    sx, sy, sz = scal_ref[0], scal_ref[1], scal_ref[2]
    dx, dy, dz = scal_ref[3], scal_ref[4], scal_ref[5]
    ux, uy, uz = scal_ref[6], scal_ref[7], scal_ref[8]
    vx, vy, vz = scal_ref[9], scal_ref[10], scal_ref[11]
    wx, wy, wz = scal_ref[12], scal_ref[13], scal_ref[14]
    wdot = scal_ref[15]

    # Dense (tile_r, 128) coordinate planes.
    xo = xyz_ref[0]
    yo = xyz_ref[1]
    zo = xyz_ref[2]

    # xyz_o - xyz_s
    ox = xo - sx
    oy = yo - sy
    oz = zo - sz

    # t = w·(xyz_d - xyz_s) / w·(xyz_o - xyz_s)   (reciprocal -> EUP path)
    denom = wx * ox + wy * oy + wz * oz
    t = wdot * pl.reciprocal(denom, approx=False)

    # r_i = xyz_s + t * (xyz_o - xyz_s);   p = r_i - xyz_d
    px = (sx + t * ox) - dx
    py = (sy + t * oy) - dy
    pz = (sz + t * oz) - dz

    # Two direct lane-dense stores (no concatenate temporary).
    uv_ref[0] = px * ux + py * uy + pz * uz
    uv_ref[1] = px * vx + py * vy + pz * vz


def _rot_x(a):
    a = jnp.asarray(a, jnp.float32)
    c, s = jnp.cos(a), jnp.sin(a)
    z, o = jnp.zeros((), jnp.float32), jnp.ones((), jnp.float32)
    return jnp.stack([jnp.stack([o, z, z]),
                      jnp.stack([z, c, -s]),
                      jnp.stack([z, s, c])])


def _rot_y(a):
    a = jnp.asarray(a, jnp.float32)
    c, s = jnp.cos(a), jnp.sin(a)
    z, o = jnp.zeros((), jnp.float32), jnp.ones((), jnp.float32)
    return jnp.stack([jnp.stack([c, z, s]),
                      jnp.stack([z, o, z]),
                      jnp.stack([-s, z, c])])


def _rot_z(a):
    a = jnp.asarray(a, jnp.float32)
    c, s = jnp.cos(a), jnp.sin(a)
    z, o = jnp.zeros((), jnp.float32), jnp.ones((), jnp.float32)
    return jnp.stack([jnp.stack([c, -s, z]),
                      jnp.stack([s, c, z]),
                      jnp.stack([z, z, o])])


class ResearchRingSimulatorPallas:
    def __init__(self, source_positions, detector_position, detector_orientation,
                 object_rotation_angle, swing_gantry_angle):
        source_positions = jnp.asarray(source_positions, jnp.float32)
        detector_position = jnp.asarray(detector_position, jnp.float32)
        detector_orientation = jnp.asarray(detector_orientation, jnp.float32)
        assert source_positions.ndim == 2 and source_positions.shape[1] == 3
        assert detector_position.shape == (3,)
        assert detector_orientation.shape == (3,)
        self.source_positions = source_positions
        self.detector_position = detector_position
        self.detector_orientation = detector_orientation
        self.object_rotation_angle = float(object_rotation_angle)
        self.swing_gantry_angle = float(swing_gantry_angle)

    def _build_scalars(self):
        # Plain-JAX glue: tiny 3x3 rotations / 3-vector setup (parameter prep).
        R_obj = _rot_z(self.object_rotation_angle)
        R_swing = _rot_z(self.swing_gantry_angle)

        src = (R_obj @ (R_swing @ self.source_positions.T)).T  # [num_sources, 3]

        roll = _rot_x(self.detector_orientation[0])
        pitch = _rot_y(self.detector_orientation[1])
        yaw = _rot_z(self.detector_orientation[2])

        u_hat = yaw @ (pitch @ (roll @ jnp.array([1.0, 0.0, 0.0], jnp.float32)))
        v_hat = yaw @ (pitch @ (roll @ jnp.array([0.0, 0.0, 1.0], jnp.float32)))

        xyz_d = R_obj @ self.detector_position
        u = R_obj @ u_hat
        v = R_obj @ v_hat
        w = jnp.cross(u, v)
        wdot = ((xyz_d[None, :] - src) * w[None, :]).sum(-1)  # [num_sources]

        ns = src.shape[0]
        scal = jnp.concatenate(
            [src,
             jnp.broadcast_to(xyz_d, (ns, 3)),
             jnp.broadcast_to(u, (ns, 3)),
             jnp.broadcast_to(v, (ns, 3)),
             jnp.broadcast_to(w, (ns, 3)),
             wdot[:, None]],
            axis=-1,
        ).astype(jnp.float32)
        return scal  # [num_sources, 16]

    def __call__(self, xyz_object):
        xyz_object = jnp.asarray(xyz_object, jnp.float32)
        if xyz_object.ndim == 1:
            xyz_object = xyz_object[None, :]
        assert xyz_object.ndim == 2 and xyz_object.shape[1] == 3

        # Only the last source survives the torch loop-overwrite; compute just it.
        scal_last = self._build_scalars()[-1]  # [16], 1-D SMEM block

        n = xyz_object.shape[0]
        r_raw = _cdiv(n, 128)                       # rows of 128 lanes
        n_tiles = max(1, _cdiv(r_raw, _TILE_R_MAX))
        if r_raw >= 16:
            # At least 2 grid steps so the "parallel" axis shards across both
            # TensorCores on v7x (no-op on single-TC v5e/v6e).
            n_tiles = max(2, n_tiles)
        tile_r = _cdiv(_cdiv(r_raw, n_tiles), 8) * 8   # multiple of 8 sublanes
        r_pad = tile_r * n_tiles
        n_pad = r_pad * 128

        # Tail-only pad, then one transpose+reshape to the dense (3, R, 128) layout.
        xyz_dense = jnp.pad(xyz_object, ((0, n_pad - n), (0, 0))).T.reshape(3, r_pad, 128)

        uv_dense = pl.pallas_call(
            _project_kernel,
            out_shape=jax.ShapeDtypeStruct((2, r_pad, 128), jnp.float32),
            grid=(n_tiles,),
            in_specs=[
                pl.BlockSpec(memory_space=pltpu.SMEM),                    # [16] scalars
                pl.BlockSpec((3, tile_r, 128), lambda i: (0, i, 0)),      # point tile
            ],
            out_specs=pl.BlockSpec((2, tile_r, 128), lambda i: (0, i, 0)),
            compiler_params=pltpu.CompilerParams(
                dimension_semantics=("parallel",)),                        # megacore on v7x
        )(scal_last, xyz_dense)

        # Back to the module's [n_batch, 2] interface (small output, cheap pass).
        return uv_dense.reshape(2, n_pad)[:, :n].T


def _reference_last_source(scal, pts):
    s = scal[-1]
    src, det = s[0:3], s[3:6]
    u, v, w, wdot = s[6:9], s[9:12], s[12:15], s[15]
    oms = pts - src
    t = wdot / (oms @ w)
    r = src + t[:, None] * oms
    return jnp.stack([(r - det) @ u, (r - det) @ v], axis=-1)


if __name__ == "__main__":
    key = jax.random.PRNGKey(0)

    # Deterministic "ring" geometry (small shapes).
    num_sources = 4
    ang = jnp.linspace(0.0, 2.0 * jnp.pi, num_sources, endpoint=False)
    ring_radius = 500.0
    source_positions = jnp.stack(
        [ring_radius * jnp.cos(ang), ring_radius * jnp.sin(ang), jnp.zeros_like(ang)],
        axis=-1,
    ).astype(jnp.float32)
    detector_position = jnp.array([0.0, -300.0, 0.0], jnp.float32)
    detector_orientation = jnp.array([0.05, 0.10, 0.20], jnp.float32)
    object_rotation_angle = 0.3
    swing_gantry_angle = 0.1

    sim = ResearchRingSimulatorPallas(
        source_positions, detector_position, detector_orientation,
        object_rotation_angle, swing_gantry_angle)

    # Object points to project: [n_batch, 3]
    x = 20.0 * jax.random.normal(key, (8, 3), dtype=jnp.float32)

    uv = sim(x)
    jax.block_until_ready(uv)

    # Correctness check against a pure-JAX reference (last-source semantics).
    ref = _reference_last_source(sim._build_scalars(), x)
    np.testing.assert_allclose(np.asarray(uv), np.asarray(ref), rtol=1e-4, atol=1e-3)

    # TODO(synk): nn.Module.forward() is literally `pass`; the projector
    # (_point_forward_projector) is implemented as the forward pass here.
    print("KERNEL_OK")
</pallas_src>

<mosaic_0001>
module attributes {stable_mosaic.version = 11 : i64} {
  func.func @_project_kernel(%arg0: i32, %arg1: memref<16xf32, #tpu.memory_space<smem>>, %arg2: memref<3x8x128xf32, #tpu.memory_space<vmem>>, %arg3: memref<2x8x128xf32, #tpu.memory_space<vmem>>) attributes {dimension_semantics = [#tpu.dimension_semantics<parallel>], iteration_bounds = array<i64: 1>, scalar_prefetch = 0 : i64, scratch_operands = 0 : i64, tpu.core_type = #tpu.core_type<tc>, window_params = [{transform_indices = @transform_0, window_bounds = array<i64: 16>}, {transform_indices = @transform_1, window_bounds = array<i64: 3, 8, 128>}, {transform_indices = @transform_2, window_bounds = array<i64: 2, 8, 128>}]} {
    %c0 = arith.constant 0 : index
    %0 = memref.load %arg1[%c0] : memref<16xf32, #tpu.memory_space<smem>>
    %c1 = arith.constant 1 : index
    %1 = memref.load %arg1[%c1] : memref<16xf32, #tpu.memory_space<smem>>
    %c2 = arith.constant 2 : index
    %2 = memref.load %arg1[%c2] : memref<16xf32, #tpu.memory_space<smem>>
    %c3 = arith.constant 3 : index
    %3 = memref.load %arg1[%c3] : memref<16xf32, #tpu.memory_space<smem>>
    %c4 = arith.constant 4 : index
    %4 = memref.load %arg1[%c4] : memref<16xf32, #tpu.memory_space<smem>>
    %c5 = arith.constant 5 : index
    %5 = memref.load %arg1[%c5] : memref<16xf32, #tpu.memory_space<smem>>
    %c6 = arith.constant 6 : index
    %6 = memref.load %arg1[%c6] : memref<16xf32, #tpu.memory_space<smem>>
    %c7 = arith.constant 7 : index
    %7 = memref.load %arg1[%c7] : memref<16xf32, #tpu.memory_space<smem>>
    %c8 = arith.constant 8 : index
    %8 = memref.load %arg1[%c8] : memref<16xf32, #tpu.memory_space<smem>>
    %c9 = arith.constant 9 : index
    %9 = memref.load %arg1[%c9] : memref<16xf32, #tpu.memory_space<smem>>
    %c10 = arith.constant 10 : index
    %10 = memref.load %arg1[%c10] : memref<16xf32, #tpu.memory_space<smem>>
    %c11 = arith.constant 11 : index
    %11 = memref.load %arg1[%c11] : memref<16xf32, #tpu.memory_space<smem>>
    %c12 = arith.constant 12 : index
    %12 = memref.load %arg1[%c12] : memref<16xf32, #tpu.memory_space<smem>>
    %c13 = arith.constant 13 : index
    %13 = memref.load %arg1[%c13] : memref<16xf32, #tpu.memory_space<smem>>
    %c14 = arith.constant 14 : index
    %14 = memref.load %arg1[%c14] : memref<16xf32, #tpu.memory_space<smem>>
    %c15 = arith.constant 15 : index
    %15 = memref.load %arg1[%c15] : memref<16xf32, #tpu.memory_space<smem>>
    %c0_0 = arith.constant 0 : index
    %c0_1 = arith.constant 0 : index
    %c0_2 = arith.constant 0 : index
    %16 = vector.load %arg2[%c0_0, %c0_1, %c0_2] : memref<3x8x128xf32, #tpu.memory_space<vmem>>, vector<1x8x128xf32>
    %17 = vector.shape_cast %16 : vector<1x8x128xf32> to vector<8x128xf32>
    %c1_3 = arith.constant 1 : index
    %c0_4 = arith.constant 0 : index
    %c0_5 = arith.constant 0 : index
    %18 = vector.load %arg2[%c1_3, %c0_4, %c0_5] : memref<3x8x128xf32, #tpu.memory_space<vmem>>, vector<1x8x128xf32>
    %19 = vector.shape_cast %18 : vector<1x8x128xf32> to vector<8x128xf32>
    %c2_6 = arith.constant 2 : index
    %c0_7 = arith.constant 0 : index
    %c0_8 = arith.constant 0 : index
    %20 = vector.load %arg2[%c2_6, %c0_7, %c0_8] : memref<3x8x128xf32, #tpu.memory_space<vmem>>, vector<1x8x128xf32>
    %21 = vector.shape_cast %20 : vector<1x8x128xf32> to vector<8x128xf32>
    %22 = vector.broadcast %0 : f32 to vector<8x128xf32>
    %23 = arith.subf %17, %22 : vector<8x128xf32>
    %24 = vector.broadcast %1 : f32 to vector<8x128xf32>
    %25 = arith.subf %19, %24 : vector<8x128xf32>
    %26 = vector.broadcast %2 : f32 to vector<8x128xf32>
    %27 = arith.subf %21, %26 : vector<8x128xf32>
    %28 = vector.broadcast %12 : f32 to vector<8x128xf32>
    %29 = arith.mulf %28, %23 : vector<8x128xf32>
    %30 = vector.broadcast %13 : f32 to vector<8x128xf32>
    %31 = arith.mulf %30, %25 : vector<8x128xf32>
    %32 = arith.addf %29, %31 : vector<8x128xf32>
    %33 = vector.broadcast %14 : f32 to vector<8x128xf32>
    %34 = arith.mulf %33, %27 : vector<8x128xf32>
    %35 = arith.addf %32, %34 : vector<8x128xf32>
    %36 = tpu.reciprocal %35 : vector<8x128xf32> -> vector<8x128xf32>
    %37 = vector.broadcast %15 : f32 to vector<8x128xf32>
    %38 = arith.mulf %37, %36 : vector<8x128xf32>
    %39 = arith.mulf %38, %23 : vector<8x128xf32>
    %40 = vector.broadcast %0 : f32 to vector<8x128xf32>
    %41 = arith.addf %40, %39 : vector<8x128xf32>
    %42 = vector.broadcast %3 : f32 to vector<8x128xf32>
    %43 = arith.subf %41, %42 : vector<8x128xf32>
    %44 = arith.mulf %38, %25 : vector<8x128xf32>
    %45 = vector.broadcast %1 : f32 to vector<8x128xf32>
    %46 = arith.addf %45, %44 : vector<8x128xf32>
    %47 = vector.broadcast %4 : f32 to vector<8x128xf32>
    %48 = arith.subf %46, %47 : vector<8x128xf32>
    %49 = arith.mulf %38, %27 : vector<8x128xf32>
    %50 = vector.broadcast %2 : f32 to vector<8x128xf32>
    %51 = arith.addf %50, %49 : vector<8x128xf32>
    %52 = vector.broadcast %5 : f32 to vector<8x128xf32>
    %53 = arith.subf %51, %52 : vector<8x128xf32>
    %54 = vector.broadcast %6 : f32 to vector<8x128xf32>
    %55 = arith.mulf %43, %54 : vector<8x128xf32>
    %56 = vector.broadcast %7 : f32 to vector<8x128xf32>
    %57 = arith.mulf %48, %56 : vector<8x128xf32>
    %58 = arith.addf %55, %57 : vector<8x128xf32>
    %59 = vector.broadcast %8 : f32 to vector<8x128xf32>
    %60 = arith.mulf %53, %59 : vector<8x128xf32>
    %61 = arith.addf %58, %60 : vector<8x128xf32>
    %c0_9 = arith.constant 0 : index
    %c0_10 = arith.constant 0 : index
    %c0_11 = arith.constant 0 : index
    %62 = vector.load %arg3[%c0_9, %c0_10, %c0_11] : memref<2x8x128xf32, #tpu.memory_space<vmem>>, vector<1x8x128xf32>
    %63 = vector.shape_cast %62 : vector<1x8x128xf32> to vector<8x128xf32>
    %64 = vector.shape_cast %61 : vector<8x128xf32> to vector<1x8x128xf32>
    tpu.vector_store %arg3[%c0_9, %c0_10, %c0_11], %64 {strides = array<i32>} : memref<2x8x128xf32, #tpu.memory_space<vmem>>, vector<1x8x128xf32>,
    %65 = vector.broadcast %9 : f32 to vector<8x128xf32>
    %66 = arith.mulf %43, %65 : vector<8x128xf32>
    %67 = vector.broadcast %10 : f32 to vector<8x128xf32>
    %68 = arith.mulf %48, %67 : vector<8x128xf32>
    %69 = arith.addf %66, %68 : vector<8x128xf32>
    %70 = vector.broadcast %11 : f32 to vector<8x128xf32>
    %71 = arith.mulf %53, %70 : vector<8x128xf32>
    %72 = arith.addf %69, %71 : vector<8x128xf32>
    %c1_12 = arith.constant 1 : index
    %c0_13 = arith.constant 0 : index
    %c0_14 = arith.constant 0 : index
    %73 = vector.load %arg3[%c1_12, %c0_13, %c0_14] : memref<2x8x128xf32, #tpu.memory_space<vmem>>, vector<1x8x128xf32>
    %74 = vector.shape_cast %73 : vector<1x8x128xf32> to vector<8x128xf32>
    %75 = vector.shape_cast %72 : vector<8x128xf32> to vector<1x8x128xf32>
    tpu.vector_store %arg3[%c1_12, %c0_13, %c0_14], %75 {strides = array<i32>} : memref<2x8x128xf32, #tpu.memory_space<vmem>>, vector<1x8x128xf32>,
    return
  }
  func.func @transform_0(%arg0: i32) -> i32 {
    %c0_i32 = arith.constant 0 : i32
    %c0_i32_0 = arith.constant 0 : i32
    return %c0_i32 : i32
  }
  func.func @transform_1(%arg0: i32) -> (i32, i32, i32) {
    %c0_i32 = arith.constant 0 : i32
    %c0_i32_0 = arith.constant 0 : i32
    %c0_i32_1 = arith.constant 0 : i32
    return %c0_i32, %arg0, %c0_i32_0 : i32, i32, i32
  }
  func.func @transform_2(%arg0: i32) -> (i32, i32, i32) {
    %c0_i32 = arith.constant 0 : i32
    %c0_i32_0 = arith.constant 0 : i32
    %c0_i32_1 = arith.constant 0 : i32
    return %c0_i32, %arg0, %c0_i32_0 : i32, i32, i32
  }
}

</mosaic_0001>

<llo_original>
// kernel: tpu_custom_call.1
$region0: #{tpu_custom_call.1}
  #allocation0 [shape = 'u32[]', space=smem, size = 0x4, offset = 0x4, fixed_abs, tag = 'smem constant byte address 0x4 - core index']
  #allocation1 [shape = 'u32[144,128]{1,0:T(1,128)}', space=vmem, size = 0x12000, scoped, tag = 'internal scratch']
  %s0 = inlined_call_operand.hbm [shape: f32[16], index: 0, kind: input, shape index: {}]
  %s1 = inlined_call_operand.hbm [shape: f32[3,8,128], index: 1, kind: input, shape index: {}]
  %s2 = inlined_call_operand.hbm [shape: f32[2,8,128], index: 2, kind: output, shape index: {}]
  %s3 = sld [smem:[#allocation0]]
  $region26: #{tpu_custom_call.1} parent=0
    _
  %s5 = ssub.s32 1, %s3
  %s6 = scalar_select 0, %s5, %s3
  $region1: #{tpu_custom_call.1} parent=0
    #allocation2 [shape = 'u8[512]{0}', space=smem, size = 0x200, scoped, tag = 'input window, operand 0, single buffered']
    #allocation3 [shape = 's32[1]{0}', space=sflag, size = 0x4, scoped, tag = 'scoped memory for tpu_custom_call.1']
    #allocation4 [shape = 's32[1]{0}', space=sflag, size = 0x4, scoped, tag = 'scoped memory for tpu_custom_call.1']
    #allocation5 [shape = 's32[1]{0}', space=sflag, size = 0x4, scoped, tag = 'scoped memory for tpu_custom_call.1']
    #allocation6 [shape = 'u8[12288]{0}', space=vmem, size = 0x3000, scoped, tag = 'input window, operand 1, single buffered']
    #allocation7 [shape = 'u8[8192]{0}', space=vmem, size = 0x2000, scoped, tag = 'output window, operand 0, single buffered']
    %7 = vsyncpa [#allocation5], 0
    %8 = vsyncpa [#allocation3], 0
    %9 = vsyncpa [#allocation4], 0
    // Predicated region
    $region2: #{tpu_custom_call.1} parent=1 // pred_check
      _
    $region3: #{tpu_custom_call.1} parent=1 // pred_check_branch
      %11 = sbr.rel (0) target = $region5
    $region4: #{tpu_custom_call.1} parent=1 // pred_region
      %s13 = ssub.s32 16, 16
      %14 = vsyncadd [#allocation5], %s13
      %17 = dma.hbm_to_smem %s0, 16, [#allocation2], [#allocation5]
    $region5: #{tpu_custom_call.1} parent=1 // pred_fallthru
      _
    // Predicated region
    $region6: #{tpu_custom_call.1} parent=1 // pred_check
      _
    $region7: #{tpu_custom_call.1} parent=1 // pred_check_branch
      %19 = sbr.rel (0) target = $region9
    $region8: #{tpu_custom_call.1} parent=1 // pred_region
      %s21 = ssub.s32 384, 384
      %22 = vsyncadd [#allocation3], %s21
      %s23 = sshll.u32 [#allocation6], 4
      %s24 = int_to_ptr.vmem [resolvable:$true] %s23
      %29 = dma.hbm_to_vmem [thread:$0]  %s1, 384, %s24, [#allocation3], 128, 128, 8
    $region9: #{tpu_custom_call.1} parent=1 // pred_fallthru
      _
    // Predicated region
    $region10: #{tpu_custom_call.1} parent=1 // pred_check
      _
    $region11: #{tpu_custom_call.1} parent=1 // pred_check_branch
      %31 = sbr.rel (0) target = $region13
    $region12: #{tpu_custom_call.1} parent=1 // pred_region
      %32 = dma.done [#allocation5], 16
    $region13: #{tpu_custom_call.1} parent=1 // pred_fallthru
      _
    // Predicated region
    $region14: #{tpu_custom_call.1} parent=1 // pred_check
      _
    $region15: #{tpu_custom_call.1} parent=1 // pred_check_branch
      %34 = sbr.rel (0) target = $region17
    $region16: #{tpu_custom_call.1} parent=1 // pred_region
      %35 = dma.done [#allocation3], 384
    $region17: #{tpu_custom_call.1} parent=1 // pred_fallthru
      _
    %36 = sfence
    %s37 = sld [smem:[#allocation2]]
    %s38 = sld [smem:[#allocation2 + $0x1]]
    %s39 = sld [smem:[#allocation2 + $0x2]]
    %s40 = sld [smem:[#allocation2 + $0x3]]
    %s41 = sld [smem:[#allocation2 + $0x4]]
    %s42 = sld [smem:[#allocation2 + $0x5]]
    %s43 = sld [smem:[#allocation2 + $0x6]]
    %s44 = sld [smem:[#allocation2 + $0x7]]
    %s45 = sld [smem:[#allocation2 + $0x8]]
    %s46 = sld [smem:[#allocation2 + $0x9]]
    %s47 = sld [smem:[#allocation2 + $0xa]]
    %s48 = sld [smem:[#allocation2 + $0xb]]
    %s49 = sld [smem:[#allocation2 + $0xc]]
    %s50 = sld [smem:[#allocation2 + $0xd]]
    %s51 = sld [smem:[#allocation2 + $0xe]]
    %s52 = sld [smem:[#allocation2 + $0xf]]
    %v53 = vld [vmem:[#allocation6] sm:$0xff]
    %s54 = scalar_lea.vmem [#allocation6], 8
    %v55 = vld [vmem:[%s54] sm:$0xff]
    %s56 = scalar_lea.vmem [#allocation6], 16
    %v57 = vld [vmem:[%s56] sm:$0xff]
    %v58 = vstv %s37
    %v59 = vsub.f32 %v53, %v58
    %v60 = vstv %s38
    %v61 = vsub.f32 %v55, %v60
    %v62 = vstv %s39
    %v63 = vsub.f32 %v57, %v62
    %v64 = vstv %s49
    %v65 = vmul.f32 %v64, %v59
    %v66 = vstv %s50
    %v67 = vmul.f32 %v66, %v61
    %v68 = vadd.f32 %v65, %v67
    %v69 = vstv %s51
    %v70 = vmul.f32 %v69, %v63
    %v71 = vadd.f32 %v68, %v70
    %v72 = vrcp.pop %v71
    %v73 = vstv %s52
    %v74 = vmul.f32 %v73, %v72
    %v75 = vmul.f32 %v74, %v59
    %v76 = vadd.f32 %v58, %v75
    %v77 = vstv %s40
    %v78 = vsub.f32 %v76, %v77
    %v79 = vmul.f32 %v74, %v61
    %v80 = vadd.f32 %v60, %v79
    %v81 = vstv %s41
    %v82 = vsub.f32 %v80, %v81
    %v83 = vmul.f32 %v74, %v63
    %v84 = vadd.f32 %v62, %v83
    %v85 = vstv %s42
    %v86 = vsub.f32 %v84, %v85
    %v87 = vstv %s43
    %v88 = vmul.f32 %v78, %v87
    %v89 = vstv %s44
    %v90 = vmul.f32 %v82, %v89
    %v91 = vadd.f32 %v88, %v90
    %v92 = vstv %s45
    %v93 = vmul.f32 %v86, %v92
    %v94 = vadd.f32 %v91, %v93
    %95 = vst [vmem:[#allocation7] sm:$0xff] %v94
    %v96 = vstv %s46
    %v97 = vmul.f32 %v78, %v96
    %v98 = vstv %s47
    %v99 = vmul.f32 %v82, %v98
    %v100 = vadd.f32 %v97, %v99
    %v101 = vstv %s48
    %v102 = vmul.f32 %v86, %v101
    %v103 = vadd.f32 %v100, %v102
    %s104 = scalar_lea.vmem [#allocation7], 8
    %105 = vst [vmem:[%s104] sm:$0xff] %v103
    // Predicated region
    $region18: #{tpu_custom_call.1} parent=1 // pred_check
      _
    $region19: #{tpu_custom_call.1} parent=1 // pred_check_branch
      %107 = sbr.rel (0) target = $region21
    $region20: #{tpu_custom_call.1} parent=1 // pred_region
      %s109 = ssub.s32 256, 256
      %110 = vsyncadd [#allocation4], %s109
      %s111 = sshll.u32 [#allocation7], 4
      %s112 = int_to_ptr.vmem [resolvable:$true] %s111
      %117 = dma.vmem_to_hbm [thread:$0]  %s112, 256, %s2, [#allocation4], 128, 128, 8
    $region21: #{tpu_custom_call.1} parent=1 // pred_fallthru
      _
    // Predicated region
    $region22: #{tpu_custom_call.1} parent=1 // pred_check
      _
    $region23: #{tpu_custom_call.1} parent=1 // pred_check_branch
      %119 = sbr.rel (0) target = $region25
    $region24: #{tpu_custom_call.1} parent=1 // pred_region
      %120 = dma.done [#allocation4], 256
    $region25: #{tpu_custom_call.1} parent=1 // pred_fallthru
      _
    %121 = vsyncpa [#allocation3], 1
    %122 = vsyncpa [#allocation4], 1
    %123 = vsyncpa [#allocation5], 1

</llo_original>
